<compile_context>
chip_gen: v5e
topology: v5e:2x2
jax: 0.10.0
libtpu: 0.0.40
codegen_flags: <defaults>
</compile_context>

<pallas_src>
import functools

import jax
import jax.numpy as jnp
from jax.experimental import pallas as pl
from jax.experimental.pallas import tpu as pltpu

BN_EPS = 1e-5


def _round_up(x, m):
    return ((x + m - 1) // m) * m


def _pick_tb(batch):
    """Batch tile: 256 matches the 256x256 MXU on v6e/v7x; fall back to B."""
    for tb in (256, 128, 64, 32, 16, 8):
        if batch % tb == 0:
            return tb
    return batch  # full-dim block is always legal


# ----------------------------------------------------------------------------
# Kernel 1: fused TN||RN projection  feat = x @ wp   (bias added in kernel 2)
# ----------------------------------------------------------------------------
def proj_kernel(x_ref, wp_ref, feat_ref, *, f_in, tk, mask_k):
    # x_ref:   (TB, tk)  f32 tile of flattened input
    # wp_ref:  (tk, 128) bf16 tile of fused TN||RN projection (zero-padded K)
    # feat_ref:(TB, 128) f32 output block, resident across the K axis
    k = pl.program_id(1)

    @pl.when(k == 0)
    def _():
        feat_ref[...] = jnp.zeros_like(feat_ref)

    xv = x_ref[...]
    if mask_k:
        # Zero the out-of-bounds K lanes of the (possibly partial) last tile.
        col = k * tk + jax.lax.broadcasted_iota(jnp.int32, xv.shape, 1)
        xv = jnp.where(col < f_in, xv, 0.0)

    feat_ref[...] += jnp.dot(
        xv.astype(jnp.bfloat16), wp_ref[...], preferred_element_type=jnp.float32
    )


# ----------------------------------------------------------------------------
# Kernel 2: `final` head with training-mode BatchNorm1d (batch statistics)
# ----------------------------------------------------------------------------
def head_kernel(
    feat_ref,          # (B, 128)  f32   x @ wp (no bias yet)
    bp_ref,            # (1, 128)        fused TN||RN bias
    w1_ref, b1_ref,    # (128, 128), (1, 128)
    g1_ref, be1_ref,   # (1, 128), (1, 128)
    w2_ref, b2_ref,    # (128, 64), (1, 64)
    g2_ref, be2_ref,   # (1, 64), (1, 64)
    w3_ref, b3_ref,    # (64, OUT_PAD), (1, OUT_PAD)
    out_ref,           # (B, OUT_PAD) f32
):
    feat = feat_ref[...] + bp_ref[...]          # torch.cat([tn_x, rn_x], 1)

    # final[0]: Linear(128, 128)
    h = jnp.dot(feat, w1_ref[...], preferred_element_type=jnp.float32) + b1_ref[...]
    # final[1]: BatchNorm1d(128), training-mode batch stats (biased variance)
    mean = jnp.mean(h, axis=0, keepdims=True)
    var = jnp.mean((h - mean) * (h - mean), axis=0, keepdims=True)
    h = (h - mean) * jax.lax.rsqrt(var + BN_EPS) * g1_ref[...] + be1_ref[...]
    # final[2]: ReLU
    h = jnp.maximum(h, 0.0)

    # final[3]: Linear(128, 64)
    h = jnp.dot(h, w2_ref[...], preferred_element_type=jnp.float32) + b2_ref[...]
    # final[4]: BatchNorm1d(64)
    mean = jnp.mean(h, axis=0, keepdims=True)
    var = jnp.mean((h - mean) * (h - mean), axis=0, keepdims=True)
    h = (h - mean) * jax.lax.rsqrt(var + BN_EPS) * g2_ref[...] + be2_ref[...]
    # final[5]: ReLU
    h = jnp.maximum(h, 0.0)

    # final[6]: Linear(64, output_size), columns zero-padded to OUT_PAD
    out = jnp.dot(h, w3_ref[...], preferred_element_type=jnp.float32) + b3_ref[...]
    out_ref[...] = out.astype(out_ref.dtype)


# ----------------------------------------------------------------------------
# One-time weight preparation (hoisted out of the per-call path)
# ----------------------------------------------------------------------------
def prepare_params(params, f_in, out_size, *, tk=4096):
    (wp, bp, w1, b1, g1, be1, w2, b2, g2, be2, w3, b3) = params

    tk = max(128, _round_up(int(tk), 128))
    tk_eff = min(tk, _round_up(f_in, 128))          # don't over-tile tiny F_in
    f_pad = _round_up(f_in, tk_eff)
    out_pad = max(128, _round_up(out_size, 128))

    # pre-pad + pre-cast the fused projection weights (one-time cost)
    wp_bf = jnp.pad(wp, ((0, f_pad - f_in), (0, 0))).astype(jnp.bfloat16)
    # lane-dense output: zero-pad the last linear's columns
    w3p = jnp.pad(w3, ((0, 0), (0, out_pad - out_size)))
    b3p = jnp.pad(b3, ((0, 0), (0, out_pad - out_size)))

    prepped = (wp_bf, bp, w1, b1, g1, be1, w2, b2, g2, be2, w3p, b3p)
    meta = dict(tk=tk_eff, f_in=f_in, f_pad=f_pad,
                out_size=out_size, out_pad=out_pad)
    return prepped, meta


# ----------------------------------------------------------------------------
# Forward pass
# ----------------------------------------------------------------------------
@functools.partial(
    jax.jit, static_argnames=("tk", "f_in", "f_pad", "out_size", "out_pad"))
def tr_forward(x_nchw, prepped, *, tk, f_in, f_pad, out_size, out_pad):
    """x_nchw: [B, C, H, W] float32.  Returns [B, output_size] float32."""
    (wp_bf, bp, w1, b1, g1, be1, w2, b2, g2, be2, w3p, b3p) = prepped

    B = x_nchw.shape[0]
    x_flat = x_nchw.reshape(B, -1)        # glue: flatten like torch .view(B, -1)
    assert x_flat.shape[1] == f_in

    TB = _pick_tb(B)
    n_b = B // TB
    n_k = f_pad // tk
    mask_k = (f_in % tk) != 0

    # explicit VMEM budget: double-buffered f32 x tile + bf16 wp tile + output
    proj_bytes = 2 * (TB * tk * 4 + tk * 128 * 2) + 2 * TB * 128 * 4
    try:
        vmem_cap = pltpu.get_tpu_info().vmem_capacity_bytes
    except Exception:  # pragma: no cover - conservative v7x-safe fallback
        vmem_cap = 64 << 20
    vmem_limit = min(max(int(1.25 * proj_bytes) + (4 << 20), 32 << 20),
                     int(0.75 * vmem_cap))

    # --- Kernel 1: projection (B-tiled "parallel", K-tiled "arbitrary") ----
    feat = pl.pallas_call(
        functools.partial(proj_kernel, f_in=f_in, tk=tk, mask_k=mask_k),
        out_shape=jax.ShapeDtypeStruct((B, 128), jnp.float32),
        grid=(n_b, n_k),
        in_specs=[
            pl.BlockSpec((TB, tk), lambda b, k: (b, k)),     # x  (B,K tiled)
            pl.BlockSpec((tk, 128), lambda b, k: (k, 0)),    # wp (K tiled)
        ],
        out_specs=pl.BlockSpec((TB, 128), lambda b, k: (b, 0)),
        compiler_params=pltpu.CompilerParams(
            dimension_semantics=("parallel", "arbitrary"),
            vmem_limit_bytes=vmem_limit,
        ),
    )(x_flat, wp_bf)

    # --- Kernel 2: head (needs full-batch BatchNorm statistics) ------------
    out = pl.pallas_call(
        head_kernel,
        out_shape=jax.ShapeDtypeStruct((B, out_pad), jnp.float32),
        grid=(1,),
        in_specs=[
            pl.BlockSpec((B, 128), lambda i: (0, 0)),         # feat
            pl.BlockSpec((1, 128), lambda i: (0, 0)),          # bp
            pl.BlockSpec((128, 128), lambda i: (0, 0)),        # w1
            pl.BlockSpec((1, 128), lambda i: (0, 0)),          # b1
            pl.BlockSpec((1, 128), lambda i: (0, 0)),          # g1
            pl.BlockSpec((1, 128), lambda i: (0, 0)),          # be1
            pl.BlockSpec((128, 64), lambda i: (0, 0)),         # w2
            pl.BlockSpec((1, 64), lambda i: (0, 0)),           # b2
            pl.BlockSpec((1, 64), lambda i: (0, 0)),           # g2
            pl.BlockSpec((1, 64), lambda i: (0, 0)),           # be2
            pl.BlockSpec((64, out_pad), lambda i: (0, 0)),     # w3 (padded)
            pl.BlockSpec((1, out_pad), lambda i: (0, 0)),      # b3 (padded)
        ],
        out_specs=pl.BlockSpec((B, out_pad), lambda i: (0, 0)),
        compiler_params=pltpu.CompilerParams(
            dimension_semantics=("arbitrary",)),
    )(feat, bp, w1, b1, g1, be1, w2, b2, g2, be2, w3p, b3p)

    return out[:, :out_size]


# ----------------------------------------------------------------------------
# Deterministic parameter init mirroring the module's shapes
# ----------------------------------------------------------------------------
def init_params(key, in_feat, output_size):
    ks = jax.random.split(key, 8)

    def lin(k, fan_in, fan_out):
        bound = 1.0 / jnp.sqrt(fan_in)
        kw, kb = jax.random.split(k)
        w = jax.random.uniform(kw, (fan_in, fan_out), jnp.float32, -bound, bound)
        b = jax.random.uniform(kb, (1, fan_out), jnp.float32, -bound, bound)
        return w, b

    # fused TN||RN projection: (in_feat -> 64) concat (in_feat -> 64)
    wt, bt = lin(ks[0], in_feat, 64)
    wr, br = lin(ks[1], in_feat, 64)
    wp = jnp.concatenate([wt, wr], axis=1)        # (in_feat, 128)
    bp = jnp.concatenate([bt, br], axis=1)        # (1, 128)

    w1, b1 = lin(ks[2], 128, 128)
    w2, b2 = lin(ks[3], 128, 64)
    w3, b3 = lin(ks[4], 64, output_size)

    # BatchNorm1d affine params: weight=1, bias=0 at init
    g1, be1 = jnp.ones((1, 128), jnp.float32), jnp.zeros((1, 128), jnp.float32)
    g2, be2 = jnp.ones((1, 64), jnp.float32), jnp.zeros((1, 64), jnp.float32)

    return (wp, bp, w1, b1, g1, be1, w2, b2, g2, be2, w3, b3)


if __name__ == "__main__":
    key = jax.random.PRNGKey(0)
    k_x, k_p = jax.random.split(key)

    # small shapes: batch=8, channels=4, spatial=16x16, output_size=16
    B, C, H, W = 8, 4, 16, 16
    OUTPUT_SIZE = 16
    F_IN = C * H * W

    x = jax.random.normal(k_x, (B, C, H, W), jnp.float32)
    raw_params = init_params(k_p, F_IN, OUTPUT_SIZE)
    prepped, meta = prepare_params(raw_params, F_IN, OUTPUT_SIZE, tk=4096)

    out = tr_forward(x, prepped, **meta)
    jax.block_until_ready(out)
    assert out.shape == (B, OUTPUT_SIZE)
    assert bool(jnp.all(jnp.isfinite(out)))
    print("KERNEL_OK")
</pallas_src>

<mosaic_0001>
module attributes {stable_mosaic.version = 11 : i64} {
  func.func @proj_kernel(%arg0: i32, %arg1: i32, %arg2: memref<8x1024xf32, #tpu.memory_space<vmem>>, %arg3: memref<1024x128xbf16, #tpu.memory_space<vmem>>, %arg4: memref<8x128xf32, #tpu.memory_space<vmem>>) attributes {dimension_semantics = [#tpu.dimension_semantics<parallel>, #tpu.dimension_semantics<arbitrary>], iteration_bounds = array<i64: 1, 1>, scalar_prefetch = 0 : i64, scratch_operands = 0 : i64, tpu.core_type = #tpu.core_type<tc>, window_params = [{transform_indices = @transform_0, window_bounds = array<i64: 8, 1024>}, {transform_indices = @transform_1, window_bounds = array<i64: 1024, 128>}, {transform_indices = @transform_2, window_bounds = array<i64: 8, 128>}]} {
    %c0_i32 = arith.constant 0 : i32
    %0 = arith.cmpi eq, %arg1, %c0_i32 : i32
    %1 = arith.extui %0 : i1 to i32
    %c0_i32_0 = arith.constant 0 : i32
    %2 = arith.cmpi ne, %1, %c0_i32_0 : i32
    scf.if %2 {
      %cst_8 = arith.constant 0.000000e+00 : f32
      %10 = vector.broadcast %cst_8 : f32 to vector<8x128xf32>
      %c0_9 = arith.constant 0 : index
      %c0_10 = arith.constant 0 : index
      %11 = vector.load %arg4[%c0_9, %c0_10] : memref<8x128xf32, #tpu.memory_space<vmem>>, vector<8x128xf32>
      tpu.vector_store %arg4[%c0_9, %c0_10], %10 {strides = array<i32>} : memref<8x128xf32, #tpu.memory_space<vmem>>, vector<8x128xf32>,
    } else {
    }
    %c0 = arith.constant 0 : index
    %c0_1 = arith.constant 0 : index
    %3 = vector.load %arg2[%c0, %c0_1] : memref<8x1024xf32, #tpu.memory_space<vmem>>, vector<8x1024xf32>
    %c0_2 = arith.constant 0 : index
    %c0_3 = arith.constant 0 : index
    %4 = vector.load %arg4[%c0_2, %c0_3] : memref<8x128xf32, #tpu.memory_space<vmem>>, vector<8x128xf32>
    %5 = arith.truncf %3 : vector<8x1024xf32> to vector<8x1024xbf16>
    %c0_4 = arith.constant 0 : index
    %c0_5 = arith.constant 0 : index
    %6 = vector.load %arg3[%c0_4, %c0_5] : memref<1024x128xbf16, #tpu.memory_space<vmem>>, vector<1024x128xbf16>
    %cst = arith.constant dense<0.000000e+00> : vector<8x128xf32>
    %7 = tpu.matmul %5, %6, %cst {dimension_numbers = #tpu.dot_dimension_numbers<[1], [0], [0], [1], [0, 0, 1, 1], [], []>} : vector<8x1024xbf16>, vector<1024x128xbf16>, vector<8x128xf32> -> vector<8x128xf32>
    %8 = arith.addf %4, %7 : vector<8x128xf32>
    %c0_6 = arith.constant 0 : index
    %c0_7 = arith.constant 0 : index
    %9 = vector.load %arg4[%c0_6, %c0_7] : memref<8x128xf32, #tpu.memory_space<vmem>>, vector<8x128xf32>
    tpu.vector_store %arg4[%c0_6, %c0_7], %8 {strides = array<i32>} : memref<8x128xf32, #tpu.memory_space<vmem>>, vector<8x128xf32>,
    return
  }
  func.func @transform_0(%arg0: i32, %arg1: i32) -> (i32, i32) {
    %c0_i32 = arith.constant 0 : i32
    return %arg0, %arg1 : i32, i32
  }
  func.func @transform_1(%arg0: i32, %arg1: i32) -> (i32, i32) {
    %c0_i32 = arith.constant 0 : i32
    %c0_i32_0 = arith.constant 0 : i32
    return %arg1, %c0_i32 : i32, i32
  }
  func.func @transform_2(%arg0: i32, %arg1: i32) -> (i32, i32) {
    %c0_i32 = arith.constant 0 : i32
    %c0_i32_0 = arith.constant 0 : i32
    return %arg0, %c0_i32 : i32, i32
  }
}

module attributes {stable_mosaic.version = 11 : i64} {
  func.func @head_kernel(%arg0: i32, %arg1: memref<8x128xf32, #tpu.memory_space<vmem>>, %arg2: memref<1x128xf32, #tpu.memory_space<vmem>>, %arg3: memref<128x128xf32, #tpu.memory_space<vmem>>, %arg4: memref<1x128xf32, #tpu.memory_space<vmem>>, %arg5: memref<1x128xf32, #tpu.memory_space<vmem>>, %arg6: memref<1x128xf32, #tpu.memory_space<vmem>>, %arg7: memref<128x64xf32, #tpu.memory_space<vmem>>, %arg8: memref<1x64xf32, #tpu.memory_space<vmem>>, %arg9: memref<1x64xf32, #tpu.memory_space<vmem>>, %arg10: memref<1x64xf32, #tpu.memory_space<vmem>>, %arg11: memref<64x128xf32, #tpu.memory_space<vmem>>, %arg12: memref<1x128xf32, #tpu.memory_space<vmem>>, %arg13: memref<8x128xf32, #tpu.memory_space<vmem>>) attributes {dimension_semantics = [#tpu.dimension_semantics<arbitrary>], iteration_bounds = array<i64: 1>, scalar_prefetch = 0 : i64, scratch_operands = 0 : i64, tpu.core_type = #tpu.core_type<tc>, window_params = [{pipeline_mode = #tpu.pipeline_mode<synchronous>, transform_indices = @transform_0, window_bounds = array<i64: 8, 128>}, {pipeline_mode = #tpu.pipeline_mode<synchronous>, transform_indices = @transform_1, window_bounds = array<i64: 1, 128>}, {pipeline_mode = #tpu.pipeline_mode<synchronous>, transform_indices = @transform_2, window_bounds = array<i64: 128, 128>}, {pipeline_mode = #tpu.pipeline_mode<synchronous>, transform_indices = @transform_3, window_bounds = array<i64: 1, 128>}, {pipeline_mode = #tpu.pipeline_mode<synchronous>, transform_indices = @transform_4, window_bounds = array<i64: 1, 128>}, {pipeline_mode = #tpu.pipeline_mode<synchronous>, transform_indices = @transform_5, window_bounds = array<i64: 1, 128>}, {pipeline_mode = #tpu.pipeline_mode<synchronous>, transform_indices = @transform_6, window_bounds = array<i64: 128, 64>}, {pipeline_mode = #tpu.pipeline_mode<synchronous>, transform_indices = @transform_7, window_bounds = array<i64: 1, 64>}, {pipeline_mode = #tpu.pipeline_mode<synchronous>, transform_indices = @transform_8, window_bounds = array<i64: 1, 64>}, {pipeline_mode = #tpu.pipeline_mode<synchronous>, transform_indices = @transform_9, window_bounds = array<i64: 1, 64>}, {pipeline_mode = #tpu.pipeline_mode<synchronous>, transform_indices = @transform_10, window_bounds = array<i64: 64, 128>}, {pipeline_mode = #tpu.pipeline_mode<synchronous>, transform_indices = @transform_11, window_bounds = array<i64: 1, 128>}, {pipeline_mode = #tpu.pipeline_mode<synchronous>, transform_indices = @transform_12, window_bounds = array<i64: 8, 128>}]} {
    %c0 = arith.constant 0 : index
    %c0_0 = arith.constant 0 : index
    %0 = vector.load %arg1[%c0, %c0_0] : memref<8x128xf32, #tpu.memory_space<vmem>>, vector<8x128xf32>
    %c0_1 = arith.constant 0 : index
    %c0_2 = arith.constant 0 : index
    %1 = vector.load %arg2[%c0_1, %c0_2] : memref<1x128xf32, #tpu.memory_space<vmem>>, vector<1x128xf32>
    %2 = vector.broadcast %1 : vector<1x128xf32> to vector<8x128xf32>
    %3 = arith.addf %0, %2 : vector<8x128xf32>
    %c0_3 = arith.constant 0 : index
    %c0_4 = arith.constant 0 : index
    %4 = vector.load %arg3[%c0_3, %c0_4] : memref<128x128xf32, #tpu.memory_space<vmem>>, vector<128x128xf32>
    %cst = arith.constant dense<0.000000e+00> : vector<8x128xf32>
    %5 = tpu.matmul %3, %4, %cst {dimension_numbers = #tpu.dot_dimension_numbers<[1], [0], [0], [1], [0, 0, 1, 1], [], []>} : vector<8x128xf32>, vector<128x128xf32>, vector<8x128xf32> -> vector<8x128xf32>
    %c0_5 = arith.constant 0 : index
    %c0_6 = arith.constant 0 : index
    %6 = vector.load %arg4[%c0_5, %c0_6] : memref<1x128xf32, #tpu.memory_space<vmem>>, vector<1x128xf32>
    %7 = vector.broadcast %6 : vector<1x128xf32> to vector<8x128xf32>
    %8 = arith.addf %5, %7 : vector<8x128xf32>
    %cst_7 = arith.constant dense<0.000000e+00> : vector<128xf32>
    %9 = vector.multi_reduction <add>, %8, %cst_7 [0] : vector<8x128xf32> to vector<128xf32>
    %10 = vector.shape_cast %9 : vector<128xf32> to vector<1x128xf32>
    %cst_8 = arith.constant 8.000000e+00 : f32
    %11 = vector.broadcast %cst_8 : f32 to vector<1x128xf32>
    %12 = arith.divf %10, %11 : vector<1x128xf32>
    %13 = vector.broadcast %12 : vector<1x128xf32> to vector<8x128xf32>
    %14 = arith.subf %8, %13 : vector<8x128xf32>
    %15 = vector.broadcast %12 : vector<1x128xf32> to vector<8x128xf32>
    %16 = arith.subf %8, %15 : vector<8x128xf32>
    %17 = arith.mulf %14, %16 : vector<8x128xf32>
    %cst_9 = arith.constant dense<0.000000e+00> : vector<128xf32>
    %18 = vector.multi_reduction <add>, %17, %cst_9 [0] : vector<8x128xf32> to vector<128xf32>
    %19 = vector.shape_cast %18 : vector<128xf32> to vector<1x128xf32>
    %cst_10 = arith.constant 8.000000e+00 : f32
    %20 = vector.broadcast %cst_10 : f32 to vector<1x128xf32>
    %21 = arith.divf %19, %20 : vector<1x128xf32>
    %22 = vector.broadcast %12 : vector<1x128xf32> to vector<8x128xf32>
    %23 = arith.subf %8, %22 : vector<8x128xf32>
    %cst_11 = arith.constant 9.99999974E-6 : f32
    %24 = vector.broadcast %cst_11 : f32 to vector<1x128xf32>
    %25 = arith.addf %21, %24 : vector<1x128xf32>
    %26 = math.rsqrt %25 : vector<1x128xf32>
    %27 = vector.broadcast %26 : vector<1x128xf32> to vector<8x128xf32>
    %28 = arith.mulf %23, %27 : vector<8x128xf32>
    %c0_12 = arith.constant 0 : index
    %c0_13 = arith.constant 0 : index
    %29 = vector.load %arg5[%c0_12, %c0_13] : memref<1x128xf32, #tpu.memory_space<vmem>>, vector<1x128xf32>
    %30 = vector.broadcast %29 : vector<1x128xf32> to vector<8x128xf32>
    %31 = arith.mulf %28, %30 : vector<8x128xf32>
    %c0_14 = arith.constant 0 : index
    %c0_15 = arith.constant 0 : index
    %32 = vector.load %arg6[%c0_14, %c0_15] : memref<1x128xf32, #tpu.memory_space<vmem>>, vector<1x128xf32>
    %33 = vector.broadcast %32 : vector<1x128xf32> to vector<8x128xf32>
    %34 = arith.addf %31, %33 : vector<8x128xf32>
    %cst_16 = arith.constant 0.000000e+00 : f32
    %35 = vector.broadcast %cst_16 : f32 to vector<8x128xf32>
    %36 = arith.maximumf %34, %35 : vector<8x128xf32>
    %c0_17 = arith.constant 0 : index
    %c0_18 = arith.constant 0 : index
    %37 = vector.load %arg7[%c0_17, %c0_18] : memref<128x64xf32, #tpu.memory_space<vmem>>, vector<128x64xf32>
    %cst_19 = arith.constant dense<0.000000e+00> : vector<8x64xf32>
    %38 = tpu.matmul %36, %37, %cst_19 {dimension_numbers = #tpu.dot_dimension_numbers<[1], [0], [0], [1], [0, 0, 1, 1], [], []>} : vector<8x128xf32>, vector<128x64xf32>, vector<8x64xf32> -> vector<8x64xf32>
    %c0_20 = arith.constant 0 : index
    %c0_21 = arith.constant 0 : index
    %39 = vector.load %arg8[%c0_20, %c0_21] : memref<1x64xf32, #tpu.memory_space<vmem>>, vector<1x64xf32>
    %40 = vector.broadcast %39 : vector<1x64xf32> to vector<8x64xf32>
    %41 = arith.addf %38, %40 : vector<8x64xf32>
    %cst_22 = arith.constant dense<0.000000e+00> : vector<64xf32>
    %42 = vector.multi_reduction <add>, %41, %cst_22 [0] : vector<8x64xf32> to vector<64xf32>
    %43 = vector.shape_cast %42 : vector<64xf32> to vector<1x64xf32>
    %cst_23 = arith.constant 8.000000e+00 : f32
    %44 = vector.broadcast %cst_23 : f32 to vector<1x64xf32>
    %45 = arith.divf %43, %44 : vector<1x64xf32>
    %46 = vector.broadcast %45 : vector<1x64xf32> to vector<8x64xf32>
    %47 = arith.subf %41, %46 : vector<8x64xf32>
    %48 = vector.broadcast %45 : vector<1x64xf32> to vector<8x64xf32>
    %49 = arith.subf %41, %48 : vector<8x64xf32>
    %50 = arith.mulf %47, %49 : vector<8x64xf32>
    %cst_24 = arith.constant dense<0.000000e+00> : vector<64xf32>
    %51 = vector.multi_reduction <add>, %50, %cst_24 [0] : vector<8x64xf32> to vector<64xf32>
    %52 = vector.shape_cast %51 : vector<64xf32> to vector<1x64xf32>
    %cst_25 = arith.constant 8.000000e+00 : f32
    %53 = vector.broadcast %cst_25 : f32 to vector<1x64xf32>
    %54 = arith.divf %52, %53 : vector<1x64xf32>
    %55 = vector.broadcast %45 : vector<1x64xf32> to vector<8x64xf32>
    %56 = arith.subf %41, %55 : vector<8x64xf32>
    %cst_26 = arith.constant 9.99999974E-6 : f32
    %57 = vector.broadcast %cst_26 : f32 to vector<1x64xf32>
    %58 = arith.addf %54, %57 : vector<1x64xf32>
    %59 = math.rsqrt %58 : vector<1x64xf32>
    %60 = vector.broadcast %59 : vector<1x64xf32> to vector<8x64xf32>
    %61 = arith.mulf %56, %60 : vector<8x64xf32>
    %c0_27 = arith.constant 0 : index
    %c0_28 = arith.constant 0 : index
    %62 = vector.load %arg9[%c0_27, %c0_28] : memref<1x64xf32, #tpu.memory_space<vmem>>, vector<1x64xf32>
    %63 = vector.broadcast %62 : vector<1x64xf32> to vector<8x64xf32>
    %64 = arith.mulf %61, %63 : vector<8x64xf32>
    %c0_29 = arith.constant 0 : index
    %c0_30 = arith.constant 0 : index
    %65 = vector.load %arg10[%c0_29, %c0_30] : memref<1x64xf32, #tpu.memory_space<vmem>>, vector<1x64xf32>
    %66 = vector.broadcast %65 : vector<1x64xf32> to vector<8x64xf32>
    %67 = arith.addf %64, %66 : vector<8x64xf32>
    %cst_31 = arith.constant 0.000000e+00 : f32
    %68 = vector.broadcast %cst_31 : f32 to vector<8x64xf32>
    %69 = arith.maximumf %67, %68 : vector<8x64xf32>
    %c0_32 = arith.constant 0 : index
    %c0_33 = arith.constant 0 : index
    %70 = vector.load %arg11[%c0_32, %c0_33] : memref<64x128xf32, #tpu.memory_space<vmem>>, vector<64x128xf32>
    %cst_34 = arith.constant dense<0.000000e+00> : vector<8x128xf32>
    %71 = tpu.matmul %69, %70, %cst_34 {dimension_numbers = #tpu.dot_dimension_numbers<[1], [0], [0], [1], [0, 0, 1, 1], [], []>} : vector<8x64xf32>, vector<64x128xf32>, vector<8x128xf32> -> vector<8x128xf32>
    %c0_35 = arith.constant 0 : index
    %c0_36 = arith.constant 0 : index
    %72 = vector.load %arg12[%c0_35, %c0_36] : memref<1x128xf32, #tpu.memory_space<vmem>>, vector<1x128xf32>
    %73 = vector.broadcast %72 : vector<1x128xf32> to vector<8x128xf32>
    %74 = arith.addf %71, %73 : vector<8x128xf32>
    %c0_37 = arith.constant 0 : index
    %c0_38 = arith.constant 0 : index
    %75 = vector.load %arg13[%c0_37, %c0_38] : memref<8x128xf32, #tpu.memory_space<vmem>>, vector<8x128xf32>
    tpu.vector_store %arg13[%c0_37, %c0_38], %74 {strides = array<i32>} : memref<8x128xf32, #tpu.memory_space<vmem>>, vector<8x128xf32>,
    return
  }
  func.func @transform_0(%arg0: i32) -> (i32, i32) {
    %c0_i32 = arith.constant 0 : i32
    %c0_i32_0 = arith.constant 0 : i32
    %c0_i32_1 = arith.constant 0 : i32
    return %c0_i32, %c0_i32_0 : i32, i32
  }
  func.func @transform_1(%arg0: i32) -> (i32, i32) {
    %c0_i32 = arith.constant 0 : i32
    %c0_i32_0 = arith.constant 0 : i32
    %c0_i32_1 = arith.constant 0 : i32
    return %c0_i32, %c0_i32_0 : i32, i32
  }
  func.func @transform_2(%arg0: i32) -> (i32, i32) {
    %c0_i32 = arith.constant 0 : i32
    %c0_i32_0 = arith.constant 0 : i32
    %c0_i32_1 = arith.constant 0 : i32
    return %c0_i32, %c0_i32_0 : i32, i32
  }
  func.func @transform_3(%arg0: i32) -> (i32, i32) {
    %c0_i32 = arith.constant 0 : i32
    %c0_i32_0 = arith.constant 0 : i32
    %c0_i32_1 = arith.constant 0 : i32
    return %c0_i32, %c0_i32_0 : i32, i32
  }
  func.func @transform_4(%arg0: i32) -> (i32, i32) {
    %c0_i32 = arith.constant 0 : i32
    %c0_i32_0 = arith.constant 0 : i32
    %c0_i32_1 = arith.constant 0 : i32
    return %c0_i32, %c0_i32_0 : i32, i32
  }
  func.func @transform_5(%arg0: i32) -> (i32, i32) {
    %c0_i32 = arith.constant 0 : i32
    %c0_i32_0 = arith.constant 0 : i32
    %c0_i32_1 = arith.constant 0 : i32
    return %c0_i32, %c0_i32_0 : i32, i32
  }
  func.func @transform_6(%arg0: i32) -> (i32, i32) {
    %c0_i32 = arith.constant 0 : i32
    %c0_i32_0 = arith.constant 0 : i32
    %c0_i32_1 = arith.constant 0 : i32
    return %c0_i32, %c0_i32_0 : i32, i32
  }
  func.func @transform_7(%arg0: i32) -> (i32, i32) {
    %c0_i32 = arith.constant 0 : i32
    %c0_i32_0 = arith.constant 0 : i32
    %c0_i32_1 = arith.constant 0 : i32
    return %c0_i32, %c0_i32_0 : i32, i32
  }
  func.func @transform_8(%arg0: i32) -> (i32, i32) {
    %c0_i32 = arith.constant 0 : i32
    %c0_i32_0 = arith.constant 0 : i32
    %c0_i32_1 = arith.constant 0 : i32
    return %c0_i32, %c0_i32_0 : i32, i32
  }
  func.func @transform_9(%arg0: i32) -> (i32, i32) {
    %c0_i32 = arith.constant 0 : i32
    %c0_i32_0 = arith.constant 0 : i32
    %c0_i32_1 = arith.constant 0 : i32
    return %c0_i32, %c0_i32_0 : i32, i32
  }
  func.func @transform_10(%arg0: i32) -> (i32, i32) {
    %c0_i32 = arith.constant 0 : i32
    %c0_i32_0 = arith.constant 0 : i32
    %c0_i32_1 = arith.constant 0 : i32
    return %c0_i32, %c0_i32_0 : i32, i32
  }
  func.func @transform_11(%arg0: i32) -> (i32, i32) {
    %c0_i32 = arith.constant 0 : i32
    %c0_i32_0 = arith.constant 0 : i32
    %c0_i32_1 = arith.constant 0 : i32
    return %c0_i32, %c0_i32_0 : i32, i32
  }
  func.func @transform_12(%arg0: i32) -> (i32, i32) {
    %c0_i32 = arith.constant 0 : i32
    %c0_i32_0 = arith.constant 0 : i32
    %c0_i32_1 = arith.constant 0 : i32
    return %c0_i32, %c0_i32_0 : i32, i32
  }
}

</mosaic_0001>

<llo_original>
// kernel: tr_forward.3
$region0: #{tr_forward.3}
  #allocation0 [shape = 'u32[]', space=smem, size = 0x4, offset = 0x4, fixed_abs, tag = 'smem constant byte address 0x4 - core index']
  #allocation1 [shape = 'u32[72,128]{1,0:T(1,128)}', space=vmem, size = 0x9000, scoped, tag = 'internal scratch']
  %s0 = inlined_call_operand.vmem [shape: f32[8,128], index: 0, kind: input, shape index: {}]
  %s1 = inlined_call_operand.vmem [shape: f32[1,128], index: 1, kind: input, shape index: {}]
  %s2 = inlined_call_operand.vmem [shape: f32[128,128], index: 2, kind: input, shape index: {}]
  %s3 = inlined_call_operand.hbm [shape: f32[1,128], index: 3, kind: input, shape index: {}]
  %s4 = inlined_call_operand.hbm [shape: f32[1,128], index: 4, kind: input, shape index: {}]
  %s5 = inlined_call_operand.hbm [shape: f32[1,128], index: 5, kind: input, shape index: {}]
  %s6 = inlined_call_operand.vmem [shape: f32[128,64], index: 6, kind: input, shape index: {}]
  %s7 = inlined_call_operand.hbm [shape: f32[1,64], index: 7, kind: input, shape index: {}]
  %s8 = inlined_call_operand.vmem [shape: f32[1,64], index: 8, kind: input, shape index: {}]
  %s9 = inlined_call_operand.vmem [shape: f32[1,64], index: 9, kind: input, shape index: {}]
  %s10 = inlined_call_operand.vmem [shape: f32[64,128], index: 10, kind: input, shape index: {}]
  %s11 = inlined_call_operand.vmem [shape: f32[1,128], index: 11, kind: input, shape index: {}]
  %s12 = inlined_call_operand.hbm [shape: f32[8,128], index: 12, kind: output, shape index: {}]
  %s13 = sld [smem:[#allocation0]]
  $region74: #{tr_forward.3} parent=0
    _
  %s15 = ssub.s32 1, %s13
  %s16 = scalar_select 0, %s15, %s13
  $region1: #{tr_forward.3} parent=0
    #allocation2 [shape = 'u8[512]{0}', space=vmem, size = 0x400, scoped, tag = 'input window, operand 3, single buffered']
    #allocation3 [shape = 's32[1]{0}', space=sflag, size = 0x4, scoped, tag = 'scoped memory for tr_forward.3']
    #allocation4 [shape = 's32[1]{0}', space=sflag, size = 0x4, scoped, tag = 'scoped memory for tr_forward.3']
    #allocation5 [shape = 'u8[512]{0}', space=vmem, size = 0x400, scoped, tag = 'input window, operand 4, single buffered']
    #allocation6 [shape = 's32[1]{0}', space=sflag, size = 0x4, scoped, tag = 'scoped memory for tr_forward.3']
    #allocation7 [shape = 'u8[512]{0}', space=vmem, size = 0x400, scoped, tag = 'input window, operand 5, single buffered']
    #allocation8 [shape = 'u8[512]{0}', space=vmem, size = 0x400, scoped, tag = 'input window, operand 7, single buffered']
    #allocation9 [shape = 's32[1]{0}', space=sflag, size = 0x4, scoped, tag = 'scoped memory for tr_forward.3']
    #allocation10 [shape = 'u8[4096]{0}', space=vmem, size = 0x1000, scoped, tag = 'output window, operand 0, single buffered']
    %17 = vsyncpa [#allocation3], 0
    %18 = vsyncpa [#allocation6], 0
    %19 = vsyncpa [#allocation9], 0
    %20 = vsyncpa [#allocation4], 0
    // Predicated region
    $region2: #{tr_forward.3} parent=1 // pred_check
      _
    $region3: #{tr_forward.3} parent=1 // pred_check_branch
      %22 = sbr.rel (0) target = $region5
    $region4: #{tr_forward.3} parent=1 // pred_region
      _
    $region5: #{tr_forward.3} parent=1 // pred_fallthru
      _
    // Predicated region
    $region6: #{tr_forward.3} parent=1 // pred_check
      _
    $region7: #{tr_forward.3} parent=1 // pred_check_branch
      %24 = sbr.rel (0) target = $region9
    $region8: #{tr_forward.3} parent=1 // pred_region
      _
    $region9: #{tr_forward.3} parent=1 // pred_fallthru
      _
    // Predicated region
    $region10: #{tr_forward.3} parent=1 // pred_check
      _
    $region11: #{tr_forward.3} parent=1 // pred_check_branch
      %26 = sbr.rel (0) target = $region13
    $region12: #{tr_forward.3} parent=1 // pred_region
      _
    $region13: #{tr_forward.3} parent=1 // pred_fallthru
      _
    // Predicated region
    $region14: #{tr_forward.3} parent=1 // pred_check
      _
    $region15: #{tr_forward.3} parent=1 // pred_check_branch
      %28 = sbr.rel (0) target = $region17
    $region16: #{tr_forward.3} parent=1 // pred_region
      %30 = vsyncadd [#allocation3], 0
      %s32 = sshll.u32 %s3, 4
      %s33 = int_to_ptr.hbm [resolvable:$true] %s32
      %s34 = sshll.u32 [#allocation2], 4
      %s35 = int_to_ptr.vmem [resolvable:$true] %s34
      %37 = dma.hbm_to_vmem [thread:$0]  %s33, 16, %s35, [#allocation3]
    $region17: #{tr_forward.3} parent=1 // pred_fallthru
      _
    // Predicated region
    $region18: #{tr_forward.3} parent=1 // pred_check
      _
    $region19: #{tr_forward.3} parent=1 // pred_check_branch
      %39 = sbr.rel (0) target = $region21
    $region20: #{tr_forward.3} parent=1 // pred_region
      %41 = vsyncadd [#allocation6], 0
      %s43 = sshll.u32 %s4, 4
      %s44 = int_to_ptr.hbm [resolvable:$true] %s43
      %s45 = sshll.u32 [#allocation5], 4
      %s46 = int_to_ptr.vmem [resolvable:$true] %s45
      %48 = dma.hbm_to_vmem [thread:$0]  %s44, 16, %s46, [#allocation6]
    $region21: #{tr_forward.3} parent=1 // pred_fallthru
      _
    // Predicated region
    $region22: #{tr_forward.3} parent=1 // pred_check
      _
    $region23: #{tr_forward.3} parent=1 // pred_check_branch
      %50 = sbr.rel (0) target = $region25
    $region24: #{tr_forward.3} parent=1 // pred_region
      %52 = vsyncadd [#allocation6], 0
      %s54 = sshll.u32 %s5, 4
      %s55 = int_to_ptr.hbm [resolvable:$true] %s54
      %s56 = sshll.u32 [#allocation7], 4
      %s57 = int_to_ptr.vmem [resolvable:$true] %s56
      %59 = dma.hbm_to_vmem [thread:$0]  %s55, 16, %s57, [#allocation6]
    $region25: #{tr_forward.3} parent=1 // pred_fallthru
      _
    // Predicated region
    $region26: #{tr_forward.3} parent=1 // pred_check
      _
    $region27: #{tr_forward.3} parent=1 // pred_check_branch
      %61 = sbr.rel (0) target = $region29
    $region28: #{tr_forward.3} parent=1 // pred_region
      _
    $region29: #{tr_forward.3} parent=1 // pred_fallthru
      _
    // Predicated region
    $region30: #{tr_forward.3} parent=1 // pred_check
      _
    $region31: #{tr_forward.3} parent=1 // pred_check_branch
      %63 = sbr.rel (0) target = $region33
    $region32: #{tr_forward.3} parent=1 // pred_region
      %65 = vsyncadd [#allocation9], 0
      %s67 = sshll.u32 %s7, 4
      %s68 = int_to_ptr.hbm [resolvable:$true] %s67
      %s69 = sshll.u32 [#allocation8], 4
      %s70 = int_to_ptr.vmem [resolvable:$true] %s69
      %72 = dma.hbm_to_vmem [thread:$0]  %s68, 16, %s70, [#allocation9]
    $region33: #{tr_forward.3} parent=1 // pred_fallthru
      _
    // Predicated region
    $region34: #{tr_forward.3} parent=1 // pred_check
      _
    $region35: #{tr_forward.3} parent=1 // pred_check_branch
      %74 = sbr.rel (0) target = $region37
    $region36: #{tr_forward.3} parent=1 // pred_region
      _
    $region37: #{tr_forward.3} parent=1 // pred_fallthru
      _
    // Predicated region
    $region38: #{tr_forward.3} parent=1 // pred_check
      _
    $region39: #{tr_forward.3} parent=1 // pred_check_branch
      %76 = sbr.rel (0) target = $region41
    $region40: #{tr_forward.3} parent=1 // pred_region
      _
    $region41: #{tr_forward.3} parent=1 // pred_fallthru
      _
    // Predicated region
    $region42: #{tr_forward.3} parent=1 // pred_check
      _
    $region43: #{tr_forward.3} parent=1 // pred_check_branch
      %78 = sbr.rel (0) target = $region45
    $region44: #{tr_forward.3} parent=1 // pred_region
      _
    $region45: #{tr_forward.3} parent=1 // pred_fallthru
      _
    // Predicated region
    $region46: #{tr_forward.3} parent=1 // pred_check
      _
    $region47: #{tr_forward.3} parent=1 // pred_check_branch
      %80 = sbr.rel (0) target = $region49
    $region48: #{tr_forward.3} parent=1 // pred_region
      _
    $region49: #{tr_forward.3} parent=1 // pred_fallthru
      _
    // Predicated region
    $region50: #{tr_forward.3} parent=1 // pred_check
      _
    $region51: #{tr_forward.3} parent=1 // pred_check_branch
      %82 = sbr.rel (0) target = $region53
    $region52: #{tr_forward.3} parent=1 // pred_region
      %84 = dma.done [#allocation3], 16
    $region53: #{tr_forward.3} parent=1 // pred_fallthru
      _
    // Predicated region
    $region54: #{tr_forward.3} parent=1 // pred_check
      _
    $region55: #{tr_forward.3} parent=1 // pred_check_branch
      %86 = sbr.rel (0) target = $region57
    $region56: #{tr_forward.3} parent=1 // pred_region
      %88 = dma.done [#allocation6], 16
    $region57: #{tr_forward.3} parent=1 // pred_fallthru
      _
    // Predicated region
    $region58: #{tr_forward.3} parent=1 // pred_check
      _
    $region59: #{tr_forward.3} parent=1 // pred_check_branch
      %90 = sbr.rel (0) target = $region61
    $region60: #{tr_forward.3} parent=1 // pred_region
      %92 = dma.done [#allocation6], 16
    $region61: #{tr_forward.3} parent=1 // pred_fallthru
      _
    // Predicated region
    $region62: #{tr_forward.3} parent=1 // pred_check
      _
    $region63: #{tr_forward.3} parent=1 // pred_check_branch
      %94 = sbr.rel (0) target = $region65
    $region64: #{tr_forward.3} parent=1 // pred_region
      %96 = dma.done [#allocation9], 16
    $region65: #{tr_forward.3} parent=1 // pred_fallthru
      _
    %v97 = vld [vmem:[%s0] sm:$0xff]
    %v98 = vld [vmem:[%s1] sm:$0x1]
    %v100 = vperm.slane %v98, 0
    %v102 = vadd.f32 %v97, %v100
    %v103 = vld [vmem:[%s2] sm:$0xff]
    %v104 = vld [vmem:[%s2 + $0x8] sm:$0xff]
    %v105 = vld [vmem:[%s2 + $0x10] sm:$0xff]
    %v106 = vld [vmem:[%s2 + $0x18] sm:$0xff]
    %v107 = vld [vmem:[%s2 + $0x20] sm:$0xff]
    %v108 = vld [vmem:[%s2 + $0x28] sm:$0xff]
    %v109 = vld [vmem:[%s2 + $0x30] sm:$0xff]
    %v110 = vld [vmem:[%s2 + $0x38] sm:$0xff]
    %v111 = vld [vmem:[%s2 + $0x40] sm:$0xff]
    %v112 = vld [vmem:[%s2 + $0x48] sm:$0xff]
    %v113 = vld [vmem:[%s2 + $0x50] sm:$0xff]
    %v114 = vld [vmem:[%s2 + $0x58] sm:$0xff]
    %v115 = vld [vmem:[%s2 + $0x60] sm:$0xff]
    %v116 = vld [vmem:[%s2 + $0x68] sm:$0xff]
    %v117 = vld [vmem:[%s2 + $0x70] sm:$0xff]
    %v118 = vld [vmem:[%s2 + $0x78] sm:$0xff]
    %v119 = vld [vmem:[#allocation2] sm:$0x1]
    %v121 = vperm.slane %v119, 0
    %123 = vmatpush.msra.mxu0 %v118
    %124 = vmatpush.msra.mxu0 %v117
    %125 = vmatpush.msra.mxu0 %v116
    %126 = vmatpush.msra.mxu0 %v115
    %127 = vmatpush.msra.mxu0 %v114
    %128 = vmatpush.msra.mxu0 %v113
    %129 = vmatpush.msra.mxu0 %v112
    %130 = vmatpush.msra.mxu0 %v111
    %131 = vmatpush.msra.mxu0 %v110
    %132 = vmatpush.msra.mxu0 %v109
    %133 = vmatpush.msra.mxu0 %v108
    %134 = vmatpush.msra.mxu0 %v107
    %135 = vmatpush.msra.mxu0 %v106
    %136 = vmatpush.msra.mxu0 %v105
    %137 = vmatpush.msra.mxu0 %v104
    %138 = vmatpush.msra.mxu0 %v103
    %139 = vmatmul.f32.gmra.mxu0 %v102
    %v140 = vpop.f32.mrf.mxu0
    %v141 = vadd.f32 %v121, %v140
    %142 = vdwg.mxu0
    %v143 = vrot.slane %v141, 4
    %v144 = vadd.f32 %v141, %v143
    %v145 = vrot.slane %v144, 2
    %v146 = vadd.f32 %v144, %v145
    %v147 = vrot.slane %v146, 1
    %v148 = vadd.f32 %v146, %v147
    %v149 = vrcp.pop 8.0
    %v150 = vmul.f32 8.0, %v149
    %v151 = vsub.f32 1.0, %v150
    %v152 = vmul.f32 %v149, %v151
    %v153 = vadd.f32 %v149, %v152
    %vm154 = vweird.f32 %v149
    %v155 = vsel %vm154, %v149, %v153
    %v156 = vmul.f32 %v148, %v155
    %v157 = vsub.f32 %v141, %v156
    %v158 = vmul.f32 %v157, %v157
    %v159 = vrot.slane %v158, 4
    %v160 = vadd.f32 %v158, %v159
    %v161 = vrot.slane %v160, 2
    %v162 = vadd.f32 %v160, %v161
    %v163 = vrot.slane %v162, 1
    %v164 = vadd.f32 %v162, %v163
    %v165 = vmul.f32 %v164, %v155
    %v166 = vadd.f32 %v165, 1e-05
    %v167 = vrsqrt.pop %v166
    %v168 = vmul.f32 %v167, %v166
    %v169 = vmul.f32 %v168, %v167
    %v170 = vmul.f32 0.5, %v169
    %v171 = vsub.f32 1.5, %v170
    %v172 = vmul.f32 %v167, %v171
    %vm173 = vweird.f32 %v166
    %vm174 = vweird.f32 %v167
    %vm175 = vmor %vm173, %vm174
    %v176 = vsel %vm175, %v167, %v172
    %v177 = vmul.f32 %v157, %v176
    %v178 = vld [vmem:[#allocation5] sm:$0x1]
    %v180 = vperm.slane %v178, 0
    %v182 = vmul.f32 %v177, %v180
    %v183 = vld [vmem:[#allocation7] sm:$0x1]
    %v185 = vperm.slane %v183, 0
    %v187 = vadd.f32 %v182, %v185
    %v188 = vmax.f32 %v187, 0.0
    %v189 = vld [vmem:[%s6] sm:$0xff]
    %v190 = vld [vmem:[%s6 + $0x8] sm:$0xff]
    %v191 = vld [vmem:[%s6 + $0x10] sm:$0xff]
    %v192 = vld [vmem:[%s6 + $0x18] sm:$0xff]
    %v193 = vld [vmem:[%s6 + $0x20] sm:$0xff]
    %v194 = vld [vmem:[%s6 + $0x28] sm:$0xff]
    %v195 = vld [vmem:[%s6 + $0x30] sm:$0xff]
    %v196 = vld [vmem:[%s6 + $0x38] sm:$0xff]
    %v197 = vld [vmem:[%s6 + $0x40] sm:$0xff]
    %v198 = vld [vmem:[%s6 + $0x48] sm:$0xff]
    %v199 = vld [vmem:[%s6 + $0x50] sm:$0xff]
    %v200 = vld [vmem:[%s6 + $0x58] sm:$0xff]
    %v201 = vld [vmem:[%s6 + $0x60] sm:$0xff]
    %v202 = vld [vmem:[%s6 + $0x68] sm:$0xff]
    %v203 = vld [vmem:[%s6 + $0x70] sm:$0xff]
    %v204 = vld [vmem:[%s6 + $0x78] sm:$0xff]
    %v205 = vld [vmem:[#allocation8] sm:$0x1]
    %v207 = vperm.slane %v205, 0
    %209 = vmatpush.msra.mxu0 %v204
    %210 = vmatpush.msra.mxu0 %v203
    %211 = vmatpush.msra.mxu0 %v202
    %212 = vmatpush.msra.mxu0 %v201
    %213 = vmatpush.msra.mxu0 %v200
    %214 = vmatpush.msra.mxu0 %v199
    %215 = vmatpush.msra.mxu0 %v198
    %216 = vmatpush.msra.mxu0 %v197
    %217 = vmatpush.msra.mxu0 %v196
    %218 = vmatpush.msra.mxu0 %v195
    %219 = vmatpush.msra.mxu0 %v194
    %220 = vmatpush.msra.mxu0 %v193
    %221 = vmatpush.msra.mxu0 %v192
    %222 = vmatpush.msra.mxu0 %v191
    %223 = vmatpush.msra.mxu0 %v190
    %224 = vmatpush.msra.mxu0 %v189
    %225 = vmatmul.f32.gmra.mxu0 %v188
    %v226 = vpop.f32.mrf.mxu0
    %v227 = vadd.f32 %v207, %v226
    %228 = vdwg.mxu0
    %vm229 = vcmask 523264
    %v230 = vsel %vm229, %v227, 0.0
    %v231 = vrot.slane %v230, 4
    %v232 = vadd.f32 %v230, %v231
    %v233 = vrot.slane %v232, 2
    %v234 = vadd.f32 %v232, %v233
    %v235 = vrot.slane %v234, 1
    %v236 = vadd.f32 %v234, %v235
    %v237 = vmul.f32 %v236, %v155
    %v238 = vsub.f32 %v227, %v237
    %v239 = vmul.f32 %v238, %v238
    %v240 = vsel %vm229, %v239, 0.0
    %v241 = vrot.slane %v240, 4
    %v242 = vadd.f32 %v240, %v241
    %v243 = vrot.slane %v242, 2
    %v244 = vadd.f32 %v242, %v243
    %v245 = vrot.slane %v244, 1
    %v246 = vadd.f32 %v244, %v245
    %v247 = vmul.f32 %v246, %v155
    %v248 = vadd.f32 %v247, 1e-05
    %v249 = vrsqrt.pop %v248
    %v250 = vmul.f32 %v249, %v248
    %v251 = vmul.f32 %v250, %v249
    %v252 = vmul.f32 0.5, %v251
    %v253 = vsub.f32 1.5, %v252
    %v254 = vmul.f32 %v249, %v253
    %vm255 = vweird.f32 %v248
    %vm256 = vweird.f32 %v249
    %vm257 = vmor %vm255, %vm256
    %v258 = vsel %vm257, %v249, %v254
    %v259 = vmul.f32 %v238, %v258
    %v260 = vld [vmem:[%s8] sm:$0x1]
    %v262 = vperm.slane %v260, 0
    %v264 = vmul.f32 %v259, %v262
    %v265 = vld [vmem:[%s9] sm:$0x1]
    %v267 = vperm.slane %v265, 0
    %v269 = vadd.f32 %v264, %v267
    %v270 = vmax.f32 %v269, 0.0
    %v271 = vld [vmem:[%s10] sm:$0xff]
    %v272 = vld [vmem:[%s10 + $0x8] sm:$0xff]
    %v273 = vld [vmem:[%s10 + $0x10] sm:$0xff]
    %v274 = vld [vmem:[%s10 + $0x18] sm:$0xff]
    %v275 = vld [vmem:[%s10 + $0x20] sm:$0xff]
    %v276 = vld [vmem:[%s10 + $0x28] sm:$0xff]
    %v277 = vld [vmem:[%s10 + $0x30] sm:$0xff]
    %v278 = vld [vmem:[%s10 + $0x38] sm:$0xff]
    %v279 = vld [vmem:[%s11] sm:$0x1]
    %v281 = vperm.slane %v279, 0
    %v284 = vsel %vm229, %v270, 0
    %286 = vmatpush.msra.mxu0 0.0
    %287 = vmatpush.msra.mxu0 0.0
    %288 = vmatpush.msra.mxu0 0.0
    %289 = vmatpush.msra.mxu0 0.0
    %290 = vmatpush.msra.mxu0 0.0
    %291 = vmatpush.msra.mxu0 0.0
    %292 = vmatpush.msra.mxu0 0.0
    %293 = vmatpush.msra.mxu0 0.0
    %294 = vmatpush.msra.mxu0 %v278
    %295 = vmatpush.msra.mxu0 %v277
    %296 = vmatpush.msra.mxu0 %v276
    %297 = vmatpush.msra.mxu0 %v275
    %298 = vmatpush.msra.mxu0 %v274
    %299 = vmatpush.msra.mxu0 %v273
    %300 = vmatpush.msra.mxu0 %v272
    %301 = vmatpush.msra.mxu0 %v271
    %302 = vmatmul.f32.gmra.mxu0 %v284
    %v303 = vpop.f32.mrf.mxu0
    %v304 = vadd.f32 %v281, %v303
    %305 = vdwg.mxu0
    %306 = vst [vmem:[#allocation10] sm:$0xff] %v304
    // Predicated region
    $region66: #{tr_forward.3} parent=1 // pred_check
      _
    $region67: #{tr_forward.3} parent=1 // pred_check_branch
      %308 = sbr.rel (0) target = $region69
    $region68: #{tr_forward.3} parent=1 // pred_region
      %310 = vsyncadd [#allocation4], 0
      %s312 = sshll.u32 [#allocation10], 4
      %s313 = int_to_ptr.vmem [resolvable:$true] %s312
      %s314 = sshll.u32 %s12, 4
      %s315 = int_to_ptr.hbm [resolvable:$true] %s314
      %317 = dma.vmem_to_hbm [thread:$0]  %s313, 128, %s315, [#allocation4]
    $region69: #{tr_forward.3} parent=1 // pred_fallthru
      _
    // Predicated region
    $region70: #{tr_forward.3} parent=1 // pred_check
      _
    $region71: #{tr_forward.3} parent=1 // pred_check_branch
      %319 = sbr.rel (0) target = $region73
    $region72: #{tr_forward.3} parent=1 // pred_region
      %321 = dma.done [#allocation4], 128
    $region73: #{tr_forward.3} parent=1 // pred_fallthru
      _
    %322 = vsyncpa [#allocation3], 1
    %323 = vsyncpa [#allocation6], 1
    %324 = vsyncpa [#allocation9], 1
    %325 = vsyncpa [#allocation4], 1

// kernel: tr_forward.2
$region0: #{tr_forward.2}
  #allocation0 [shape = 'u32[]', space=smem, size = 0x4, offset = 0x4, fixed_abs, tag = 'smem constant byte address 0x4 - core index']
  #allocation1 [shape = 'u32[72,128]{1,0:T(1,128)}', space=vmem, size = 0x9000, scoped, tag = 'internal scratch']
  %s0 = inlined_call_operand.vmem [shape: f32[8,1024], index: 0, kind: input, shape index: {}]
  %s1 = inlined_call_operand.vmem [shape: bf16[1024,128], index: 1, kind: input, shape index: {}]
  %s2 = inlined_call_operand.vmem [shape: f32[8,128], index: 2, kind: output, shape index: {}]
  %s3 = sld [smem:[#allocation0]]
  $region22: #{tr_forward.2} parent=0
    _
  %s5 = ssub.s32 1, %s3
  %s6 = scalar_select 0, %s5, %s3
  // Predicated region
  $region2: #{tr_forward.2} parent=0 // pred_check
    _
  $region3: #{tr_forward.2} parent=0 // pred_check_branch
    %8 = sbr.rel (0) target = $region5
  $region4: #{tr_forward.2} parent=0 // pred_region
    _
  $region5: #{tr_forward.2} parent=0 // pred_fallthru
    _
  // Predicated region
  $region6: #{tr_forward.2} parent=0 // pred_check
    _
  $region7: #{tr_forward.2} parent=0 // pred_check_branch
    %10 = sbr.rel (0) target = $region9
  $region8: #{tr_forward.2} parent=0 // pred_region
    _
  $region9: #{tr_forward.2} parent=0 // pred_fallthru
    _
  %p11 = scmp.eq.s32.totalorder 0, 0
  // Predicated region
  $region10: #{tr_forward.2} parent=0 // pred_check
    %p12 = pneg %p11
  $region11: #{tr_forward.2} parent=0 // pred_check_branch
    %14 = sbr.rel (%p12) target = $region13
  $region12: #{tr_forward.2} parent=0 // pred_region
    %15 = vst [vmem:[%s2] sm:$0xff] 0.0
  $region13: #{tr_forward.2} parent=0 // pred_fallthru
    _
  %v16 = vld [vmem:[%s0] sm:$0xff]
  %v17 = vld [vmem:[%s0 + $0x8] sm:$0xff]
  %v18 = vld [vmem:[%s0 + $0x10] sm:$0xff]
  %v19 = vld [vmem:[%s0 + $0x18] sm:$0xff]
  %v20 = vld [vmem:[%s0 + $0x20] sm:$0xff]
  %v21 = vld [vmem:[%s0 + $0x28] sm:$0xff]
  %v22 = vld [vmem:[%s0 + $0x30] sm:$0xff]
  %v23 = vld [vmem:[%s0 + $0x38] sm:$0xff]
  %v24 = vld [vmem:[%s2] sm:$0xff]
  %v25 = vpack.c.bf16 %v16, %v16
  %v26 = vpack.c.bf16 %v17, %v17
  %v27 = vpack.c.bf16 %v18, %v18
  %v28 = vpack.c.bf16 %v19, %v19
  %v29 = vpack.c.bf16 %v20, %v20
  %v30 = vpack.c.bf16 %v21, %v21
  %v31 = vpack.c.bf16 %v22, %v22
  %v32 = vpack.c.bf16 %v23, %v23
  %v33 = vld [vmem:[%s1] sm:$0xf]
  %v34 = vld [vmem:[%s1 + $0x4] sm:$0xf]
  %v35 = vld [vmem:[%s1 + $0x8] sm:$0xf]
  %v36 = vld [vmem:[%s1 + $0xc] sm:$0xf]
  %v37 = vld [vmem:[%s1 + $0x10] sm:$0xf]
  %v38 = vld [vmem:[%s1 + $0x14] sm:$0xf]
  %v39 = vld [vmem:[%s1 + $0x18] sm:$0xf]
  %v40 = vld [vmem:[%s1 + $0x1c] sm:$0xf]
  %v41 = vld [vmem:[%s1 + $0x20] sm:$0xf]
  %v42 = vld [vmem:[%s1 + $0x24] sm:$0xf]
  %v43 = vld [vmem:[%s1 + $0x28] sm:$0xf]
  %v44 = vld [vmem:[%s1 + $0x2c] sm:$0xf]
  %v45 = vld [vmem:[%s1 + $0x30] sm:$0xf]
  %v46 = vld [vmem:[%s1 + $0x34] sm:$0xf]
  %v47 = vld [vmem:[%s1 + $0x38] sm:$0xf]
  %v48 = vld [vmem:[%s1 + $0x3c] sm:$0xf]
  %v49 = vld [vmem:[%s1 + $0x40] sm:$0xf]
  %v50 = vld [vmem:[%s1 + $0x44] sm:$0xf]
  %v51 = vld [vmem:[%s1 + $0x48] sm:$0xf]
  %v52 = vld [vmem:[%s1 + $0x4c] sm:$0xf]
  %v53 = vld [vmem:[%s1 + $0x50] sm:$0xf]
  %v54 = vld [vmem:[%s1 + $0x54] sm:$0xf]
  %v55 = vld [vmem:[%s1 + $0x58] sm:$0xf]
  %v56 = vld [vmem:[%s1 + $0x5c] sm:$0xf]
  %v57 = vld [vmem:[%s1 + $0x60] sm:$0xf]
  %v58 = vld [vmem:[%s1 + $0x64] sm:$0xf]
  %v59 = vld [vmem:[%s1 + $0x68] sm:$0xf]
  %v60 = vld [vmem:[%s1 + $0x6c] sm:$0xf]
  %v61 = vld [vmem:[%s1 + $0x70] sm:$0xf]
  %v62 = vld [vmem:[%s1 + $0x74] sm:$0xf]
  %v63 = vld [vmem:[%s1 + $0x78] sm:$0xf]
  %v64 = vld [vmem:[%s1 + $0x7c] sm:$0xf]
  %v65 = vld [vmem:[%s1 + $0x80] sm:$0xf]
  %v66 = vld [vmem:[%s1 + $0x84] sm:$0xf]
  %v67 = vld [vmem:[%s1 + $0x88] sm:$0xf]
  %v68 = vld [vmem:[%s1 + $0x8c] sm:$0xf]
  %v69 = vld [vmem:[%s1 + $0x90] sm:$0xf]
  %v70 = vld [vmem:[%s1 + $0x94] sm:$0xf]
  %v71 = vld [vmem:[%s1 + $0x98] sm:$0xf]
  %v72 = vld [vmem:[%s1 + $0x9c] sm:$0xf]
  %v73 = vld [vmem:[%s1 + $0xa0] sm:$0xf]
  %v74 = vld [vmem:[%s1 + $0xa4] sm:$0xf]
  %v75 = vld [vmem:[%s1 + $0xa8] sm:$0xf]
  %v76 = vld [vmem:[%s1 + $0xac] sm:$0xf]
  %v77 = vld [vmem:[%s1 + $0xb0] sm:$0xf]
  %v78 = vld [vmem:[%s1 + $0xb4] sm:$0xf]
  %v79 = vld [vmem:[%s1 + $0xb8] sm:$0xf]
  %v80 = vld [vmem:[%s1 + $0xbc] sm:$0xf]
  %v81 = vld [vmem:[%s1 + $0xc0] sm:$0xf]
  %v82 = vld [vmem:[%s1 + $0xc4] sm:$0xf]
  %v83 = vld [vmem:[%s1 + $0xc8] sm:$0xf]
  %v84 = vld [vmem:[%s1 + $0xcc] sm:$0xf]
  %v85 = vld [vmem:[%s1 + $0xd0] sm:$0xf]
  %v86 = vld [vmem:[%s1 + $0xd4] sm:$0xf]
  %v87 = vld [vmem:[%s1 + $0xd8] sm:$0xf]
  %v88 = vld [vmem:[%s1 + $0xdc] sm:$0xf]
  %v89 = vld [vmem:[%s1 + $0xe0] sm:$0xf]
  %v90 = vld [vmem:[%s1 + $0xe4] sm:$0xf]
  %v91 = vld [vmem:[%s1 + $0xe8] sm:$0xf]
  %v92 = vld [vmem:[%s1 + $0xec] sm:$0xf]
  %v93 = vld [vmem:[%s1 + $0xf0] sm:$0xf]
  %v94 = vld [vmem:[%s1 + $0xf4] sm:$0xf]
  %v95 = vld [vmem:[%s1 + $0xf8] sm:$0xf]
  %v96 = vld [vmem:[%s1 + $0xfc] sm:$0xf]
  %v97 = vld [vmem:[%s1 + $0x100] sm:$0xf]
  %v98 = vld [vmem:[%s1 + $0x104] sm:$0xf]
  %v99 = vld [vmem:[%s1 + $0x108] sm:$0xf]
  %v100 = vld [vmem:[%s1 + $0x10c] sm:$0xf]
  %v101 = vld [vmem:[%s1 + $0x110] sm:$0xf]
  %v102 = vld [vmem:[%s1 + $0x114] sm:$0xf]
  %v103 = vld [vmem:[%s1 + $0x118] sm:$0xf]
  %v104 = vld [vmem:[%s1 + $0x11c] sm:$0xf]
  %v105 = vld [vmem:[%s1 + $0x120] sm:$0xf]
  %v106 = vld [vmem:[%s1 + $0x124] sm:$0xf]
  %v107 = vld [vmem:[%s1 + $0x128] sm:$0xf]
  %v108 = vld [vmem:[%s1 + $0x12c] sm:$0xf]
  %v109 = vld [vmem:[%s1 + $0x130] sm:$0xf]
  %v110 = vld [vmem:[%s1 + $0x134] sm:$0xf]
  %v111 = vld [vmem:[%s1 + $0x138] sm:$0xf]
  %v112 = vld [vmem:[%s1 + $0x13c] sm:$0xf]
  %v113 = vld [vmem:[%s1 + $0x140] sm:$0xf]
  %v114 = vld [vmem:[%s1 + $0x144] sm:$0xf]
  %v115 = vld [vmem:[%s1 + $0x148] sm:$0xf]
  %v116 = vld [vmem:[%s1 + $0x14c] sm:$0xf]
  %v117 = vld [vmem:[%s1 + $0x150] sm:$0xf]
  %v118 = vld [vmem:[%s1 + $0x154] sm:$0xf]
  %v119 = vld [vmem:[%s1 + $0x158] sm:$0xf]
  %v120 = vld [vmem:[%s1 + $0x15c] sm:$0xf]
  %v121 = vld [vmem:[%s1 + $0x160] sm:$0xf]
  %v122 = vld [vmem:[%s1 + $0x164] sm:$0xf]
  %v123 = vld [vmem:[%s1 + $0x168] sm:$0xf]
  %v124 = vld [vmem:[%s1 + $0x16c] sm:$0xf]
  %v125 = vld [vmem:[%s1 + $0x170] sm:$0xf]
  %v126 = vld [vmem:[%s1 + $0x174] sm:$0xf]
  %v127 = vld [vmem:[%s1 + $0x178] sm:$0xf]
  %v128 = vld [vmem:[%s1 + $0x17c] sm:$0xf]
  %v129 = vld [vmem:[%s1 + $0x180] sm:$0xf]
  %v130 = vld [vmem:[%s1 + $0x184] sm:$0xf]
  %v131 = vld [vmem:[%s1 + $0x188] sm:$0xf]
  %v132 = vld [vmem:[%s1 + $0x18c] sm:$0xf]
  %v133 = vld [vmem:[%s1 + $0x190] sm:$0xf]
  %v134 = vld [vmem:[%s1 + $0x194] sm:$0xf]
  %v135 = vld [vmem:[%s1 + $0x198] sm:$0xf]
  %v136 = vld [vmem:[%s1 + $0x19c] sm:$0xf]
  %v137 = vld [vmem:[%s1 + $0x1a0] sm:$0xf]
  %v138 = vld [vmem:[%s1 + $0x1a4] sm:$0xf]
  %v139 = vld [vmem:[%s1 + $0x1a8] sm:$0xf]
  %v140 = vld [vmem:[%s1 + $0x1ac] sm:$0xf]
  %v141 = vld [vmem:[%s1 + $0x1b0] sm:$0xf]
  %v142 = vld [vmem:[%s1 + $0x1b4] sm:$0xf]
  %v143 = vld [vmem:[%s1 + $0x1b8] sm:$0xf]
  %v144 = vld [vmem:[%s1 + $0x1bc] sm:$0xf]
  %v145 = vld [vmem:[%s1 + $0x1c0] sm:$0xf]
  %v146 = vld [vmem:[%s1 + $0x1c4] sm:$0xf]
  %v147 = vld [vmem:[%s1 + $0x1c8] sm:$0xf]
  %v148 = vld [vmem:[%s1 + $0x1cc] sm:$0xf]
  %v149 = vld [vmem:[%s1 + $0x1d0] sm:$0xf]
  %v150 = vld [vmem:[%s1 + $0x1d4] sm:$0xf]
  %v151 = vld [vmem:[%s1 + $0x1d8] sm:$0xf]
  %v152 = vld [vmem:[%s1 + $0x1dc] sm:$0xf]
  %v153 = vld [vmem:[%s1 + $0x1e0] sm:$0xf]
  %v154 = vld [vmem:[%s1 + $0x1e4] sm:$0xf]
  %v155 = vld [vmem:[%s1 + $0x1e8] sm:$0xf]
  %v156 = vld [vmem:[%s1 + $0x1ec] sm:$0xf]
  %v157 = vld [vmem:[%s1 + $0x1f0] sm:$0xf]
  %v158 = vld [vmem:[%s1 + $0x1f4] sm:$0xf]
  %v159 = vld [vmem:[%s1 + $0x1f8] sm:$0xf]
  %v160 = vld [vmem:[%s1 + $0x1fc] sm:$0xf]
  %v289 = vunpack.c.l.b16 %v33
  %v290 = vunpack.c.l.b16 %v34
  %v291 = vunpack.c.l.b16 %v35
  %v292 = vunpack.c.l.b16 %v36
  %v293 = vunpack.c.l.b16 %v37
  %v294 = vunpack.c.l.b16 %v38
  %v295 = vunpack.c.l.b16 %v39
  %v296 = vunpack.c.l.b16 %v40
  %v297 = vunpack.c.l.b16 %v41
  %v298 = vunpack.c.l.b16 %v42
  %v299 = vunpack.c.l.b16 %v43
  %v300 = vunpack.c.l.b16 %v44
  %v301 = vunpack.c.l.b16 %v45
  %v302 = vunpack.c.l.b16 %v46
  %v303 = vunpack.c.l.b16 %v47
  %v304 = vunpack.c.l.b16 %v48
  %v305 = vunpack.c.l.b16 %v49
  %v306 = vunpack.c.l.b16 %v50
  %v307 = vunpack.c.l.b16 %v51
  %v308 = vunpack.c.l.b16 %v52
  %v309 = vunpack.c.l.b16 %v53
  %v310 = vunpack.c.l.b16 %v54
  %v311 = vunpack.c.l.b16 %v55
  %v312 = vunpack.c.l.b16 %v56
  %v313 = vunpack.c.l.b16 %v57
  %v314 = vunpack.c.l.b16 %v58
  %v315 = vunpack.c.l.b16 %v59
  %v316 = vunpack.c.l.b16 %v60
  %v317 = vunpack.c.l.b16 %v61
  %v318 = vunpack.c.l.b16 %v62
  %v319 = vunpack.c.l.b16 %v63
  %v320 = vunpack.c.l.b16 %v64
  %v321 = vunpack.c.l.b16 %v65
  %v322 = vunpack.c.l.b16 %v66
  %v323 = vunpack.c.l.b16 %v67
  %v324 = vunpack.c.l.b16 %v68
  %v325 = vunpack.c.l.b16 %v69
  %v326 = vunpack.c.l.b16 %v70
  %v327 = vunpack.c.l.b16 %v71
  %v328 = vunpack.c.l.b16 %v72
  %v329 = vunpack.c.l.b16 %v73
  %v330 = vunpack.c.l.b16 %v74
  %v331 = vunpack.c.l.b16 %v75
  %v332 = vunpack.c.l.b16 %v76
  %v333 = vunpack.c.l.b16 %v77
  %v334 = vunpack.c.l.b16 %v78
  %v335 = vunpack.c.l.b16 %v79
  %v336 = vunpack.c.l.b16 %v80
  %v337 = vunpack.c.l.b16 %v81
  %v338 = vunpack.c.l.b16 %v82
  %v339 = vunpack.c.l.b16 %v83
  %v340 = vunpack.c.l.b16 %v84
  %v341 = vunpack.c.l.b16 %v85
  %v342 = vunpack.c.l.b16 %v86
  %v343 = vunpack.c.l.b16 %v87
  %v344 = vunpack.c.l.b16 %v88
  %v345 = vunpack.c.l.b16 %v89
  %v346 = vunpack.c.l.b16 %v90
  %v347 = vunpack.c.l.b16 %v91
  %v348 = vunpack.c.l.b16 %v92
  %v349 = vunpack.c.l.b16 %v93
  %v350 = vunpack.c.l.b16 %v94
  %v351 = vunpack.c.l.b16 %v95
  %v352 = vunpack.c.l.b16 %v96
  %v353 = vunpack.c.l.b16 %v97
  %v354 = vunpack.c.l.b16 %v98
  %v355 = vunpack.c.l.b16 %v99
  %v356 = vunpack.c.l.b16 %v100
  %v357 = vunpack.c.l.b16 %v101
  %v358 = vunpack.c.l.b16 %v102
  %v359 = vunpack.c.l.b16 %v103
  %v360 = vunpack.c.l.b16 %v104
  %v361 = vunpack.c.l.b16 %v105
  %v362 = vunpack.c.l.b16 %v106
  %v363 = vunpack.c.l.b16 %v107
  %v364 = vunpack.c.l.b16 %v108
  %v365 = vunpack.c.l.b16 %v109
  %v366 = vunpack.c.l.b16 %v110
  %v367 = vunpack.c.l.b16 %v111
  %v368 = vunpack.c.l.b16 %v112
  %v369 = vunpack.c.l.b16 %v113
  %v370 = vunpack.c.l.b16 %v114
  %v371 = vunpack.c.l.b16 %v115
  %v372 = vunpack.c.l.b16 %v116
  %v373 = vunpack.c.l.b16 %v117
  %v374 = vunpack.c.l.b16 %v118
  %v375 = vunpack.c.l.b16 %v119
  %v376 = vunpack.c.l.b16 %v120
  %v377 = vunpack.c.l.b16 %v121
  %v378 = vunpack.c.l.b16 %v122
  %v379 = vunpack.c.l.b16 %v123
  %v380 = vunpack.c.l.b16 %v124
  %v381 = vunpack.c.l.b16 %v125
  %v382 = vunpack.c.l.b16 %v126
  %v383 = vunpack.c.l.b16 %v127
  %v384 = vunpack.c.l.b16 %v128
  %v385 = vunpack.c.l.b16 %v129
  %v386 = vunpack.c.l.b16 %v130
  %v387 = vunpack.c.l.b16 %v131
  %v388 = vunpack.c.l.b16 %v132
  %v389 = vunpack.c.l.b16 %v133
  %v390 = vunpack.c.l.b16 %v134
  %v391 = vunpack.c.l.b16 %v135
  %v392 = vunpack.c.l.b16 %v136
  %v393 = vunpack.c.l.b16 %v137
  %v394 = vunpack.c.l.b16 %v138
  %v395 = vunpack.c.l.b16 %v139
  %v396 = vunpack.c.l.b16 %v140
  %v397 = vunpack.c.l.b16 %v141
  %v398 = vunpack.c.l.b16 %v142
  %v399 = vunpack.c.l.b16 %v143
  %v400 = vunpack.c.l.b16 %v144
  %v401 = vunpack.c.l.b16 %v145
  %v402 = vunpack.c.l.b16 %v146
  %v403 = vunpack.c.l.b16 %v147
  %v404 = vunpack.c.l.b16 %v148
  %v405 = vunpack.c.l.b16 %v149
  %v406 = vunpack.c.l.b16 %v150
  %v407 = vunpack.c.l.b16 %v151
  %v408 = vunpack.c.l.b16 %v152
  %v409 = vunpack.c.l.b16 %v153
  %v410 = vunpack.c.l.b16 %v154
  %v411 = vunpack.c.l.b16 %v155
  %v412 = vunpack.c.l.b16 %v156
  %v413 = vunpack.c.l.b16 %v157
  %v414 = vunpack.c.l.b16 %v158
  %v415 = vunpack.c.l.b16 %v159
  %v416 = vunpack.c.l.b16 %v160
  %v417 = vpack.c.b16 %v290, %v289
  %v418 = vpack.c.b16 %v292, %v291
  %v419 = vpack.c.b16 %v294, %v293
  %v420 = vpack.c.b16 %v296, %v295
  %v421 = vpack.c.b16 %v298, %v297
  %v422 = vpack.c.b16 %v300, %v299
  %v423 = vpack.c.b16 %v302, %v301
  %v424 = vpack.c.b16 %v304, %v303
  %v425 = vpack.c.b16 %v306, %v305
  %v426 = vpack.c.b16 %v308, %v307
  %v427 = vpack.c.b16 %v310, %v309
  %v428 = vpack.c.b16 %v312, %v311
  %v429 = vpack.c.b16 %v314, %v313
  %v430 = vpack.c.b16 %v316, %v315
  %v431 = vpack.c.b16 %v318, %v317
  %v432 = vpack.c.b16 %v320, %v319
  %v433 = vpack.c.b16 %v322, %v321
  %v434 = vpack.c.b16 %v324, %v323
  %v435 = vpack.c.b16 %v326, %v325
  %v436 = vpack.c.b16 %v328, %v327
  %v437 = vpack.c.b16 %v330, %v329
  %v438 = vpack.c.b16 %v332, %v331
  %v439 = vpack.c.b16 %v334, %v333
  %v440 = vpack.c.b16 %v336, %v335
  %v441 = vpack.c.b16 %v338, %v337
  %v442 = vpack.c.b16 %v340, %v339
  %v443 = vpack.c.b16 %v342, %v341
  %v444 = vpack.c.b16 %v344, %v343
  %v445 = vpack.c.b16 %v346, %v345
  %v446 = vpack.c.b16 %v348, %v347
  %v447 = vpack.c.b16 %v350, %v349
  %v448 = vpack.c.b16 %v352, %v351
  %v449 = vpack.c.b16 %v354, %v353
  %v450 = vpack.c.b16 %v356, %v355
  %v451 = vpack.c.b16 %v358, %v357
  %v452 = vpack.c.b16 %v360, %v359
  %v453 = vpack.c.b16 %v362, %v361
  %v454 = vpack.c.b16 %v364, %v363
  %v455 = vpack.c.b16 %v366, %v365
  %v456 = vpack.c.b16 %v368, %v367
  %v457 = vpack.c.b16 %v370, %v369
  %v458 = vpack.c.b16 %v372, %v371
  %v459 = vpack.c.b16 %v374, %v373
  %v460 = vpack.c.b16 %v376, %v375
  %v461 = vpack.c.b16 %v378, %v377
  %v462 = vpack.c.b16 %v380, %v379
  %v463 = vpack.c.b16 %v382, %v381
  %v464 = vpack.c.b16 %v384, %v383
  %v465 = vpack.c.b16 %v386, %v385
  %v466 = vpack.c.b16 %v388, %v387
  %v467 = vpack.c.b16 %v390, %v389
  %v468 = vpack.c.b16 %v392, %v391
  %v469 = vpack.c.b16 %v394, %v393
  %v470 = vpack.c.b16 %v396, %v395
  %v471 = vpack.c.b16 %v398, %v397
  %v472 = vpack.c.b16 %v400, %v399
  %v473 = vpack.c.b16 %v402, %v401
  %v474 = vpack.c.b16 %v404, %v403
  %v475 = vpack.c.b16 %v406, %v405
  %v476 = vpack.c.b16 %v408, %v407
  %v477 = vpack.c.b16 %v410, %v409
  %v478 = vpack.c.b16 %v412, %v411
  %v479 = vpack.c.b16 %v414, %v413
  %v480 = vpack.c.b16 %v416, %v415
  %545 = vmatpush.bf16.msra.mxu0 %v424
  %546 = vmatpush.bf16.msra.mxu0 %v423
  %547 = vmatpush.bf16.msra.mxu0 %v422
  %548 = vmatpush.bf16.msra.mxu0 %v421
  %549 = vmatpush.bf16.msra.mxu0 %v420
  %550 = vmatpush.bf16.msra.mxu0 %v419
  %551 = vmatpush.bf16.msra.mxu0 %v418
  %552 = vmatpush.bf16.msra.mxu0 %v417
  %553 = vmatmul.bf16.gmra.mxu0 %v25
  %v554 = vpop.f32.mrf.mxu0
  %v555 = vadd.f32 0.0, %v554
  %v556 = vpop.f32.mrf.mxu0
  %557 = vdwg.mxu0
  %558 = vmatpush.bf16.msra.mxu0 %v432
  %559 = vmatpush.bf16.msra.mxu0 %v431
  %560 = vmatpush.bf16.msra.mxu0 %v430
  %561 = vmatpush.bf16.msra.mxu0 %v429
  %562 = vmatpush.bf16.msra.mxu0 %v428
  %563 = vmatpush.bf16.msra.mxu0 %v427
  %564 = vmatpush.bf16.msra.mxu0 %v426
  %565 = vmatpush.bf16.msra.mxu0 %v425
  %566 = vmatmul.bf16.gmra.mxu0 %v26
  %v567 = vpop.f32.mrf.mxu0
  %v568 = vadd.f32 %v555, %v567
  %v569 = vpop.f32.mrf.mxu0
  %570 = vdwg.mxu0
  %571 = vmatpush.bf16.msra.mxu0 %v440
  %572 = vmatpush.bf16.msra.mxu0 %v439
  %573 = vmatpush.bf16.msra.mxu0 %v438
  %574 = vmatpush.bf16.msra.mxu0 %v437
  %575 = vmatpush.bf16.msra.mxu0 %v436
  %576 = vmatpush.bf16.msra.mxu0 %v435
  %577 = vmatpush.bf16.msra.mxu0 %v434
  %578 = vmatpush.bf16.msra.mxu0 %v433
  %579 = vmatmul.bf16.gmra.mxu0 %v27
  %v580 = vpop.f32.mrf.mxu0
  %v581 = vadd.f32 %v568, %v580
  %v582 = vpop.f32.mrf.mxu0
  %583 = vdwg.mxu0
  %584 = vmatpush.bf16.msra.mxu0 %v448
  %585 = vmatpush.bf16.msra.mxu0 %v447
  %586 = vmatpush.bf16.msra.mxu0 %v446
  %587 = vmatpush.bf16.msra.mxu0 %v445
  %588 = vmatpush.bf16.msra.mxu0 %v444
  %589 = vmatpush.bf16.msra.mxu0 %v443
  %590 = vmatpush.bf16.msra.mxu0 %v442
  %591 = vmatpush.bf16.msra.mxu0 %v441
  %592 = vmatmul.bf16.gmra.mxu0 %v28
  %v593 = vpop.f32.mrf.mxu0
  %v594 = vadd.f32 %v581, %v593
  %v595 = vpop.f32.mrf.mxu0
  %596 = vdwg.mxu0
  %597 = vmatpush.bf16.msra.mxu0 %v456
  %598 = vmatpush.bf16.msra.mxu0 %v455
  %599 = vmatpush.bf16.msra.mxu0 %v454
  %600 = vmatpush.bf16.msra.mxu0 %v453
  %601 = vmatpush.bf16.msra.mxu0 %v452
  %602 = vmatpush.bf16.msra.mxu0 %v451
  %603 = vmatpush.bf16.msra.mxu0 %v450
  %604 = vmatpush.bf16.msra.mxu0 %v449
  %605 = vmatmul.bf16.gmra.mxu0 %v29
  %v606 = vpop.f32.mrf.mxu0
  %v607 = vadd.f32 %v594, %v606
  %v608 = vpop.f32.mrf.mxu0
  %609 = vdwg.mxu0
  %610 = vmatpush.bf16.msra.mxu0 %v464
  %611 = vmatpush.bf16.msra.mxu0 %v463
  %612 = vmatpush.bf16.msra.mxu0 %v462
  %613 = vmatpush.bf16.msra.mxu0 %v461
  %614 = vmatpush.bf16.msra.mxu0 %v460
  %615 = vmatpush.bf16.msra.mxu0 %v459
  %616 = vmatpush.bf16.msra.mxu0 %v458
  %617 = vmatpush.bf16.msra.mxu0 %v457
  %618 = vmatmul.bf16.gmra.mxu0 %v30
  %v619 = vpop.f32.mrf.mxu0
  %v620 = vadd.f32 %v607, %v619
  %v621 = vpop.f32.mrf.mxu0
  %622 = vdwg.mxu0
  %623 = vmatpush.bf16.msra.mxu0 %v472
  %624 = vmatpush.bf16.msra.mxu0 %v471
  %625 = vmatpush.bf16.msra.mxu0 %v470
  %626 = vmatpush.bf16.msra.mxu0 %v469
  %627 = vmatpush.bf16.msra.mxu0 %v468
  %628 = vmatpush.bf16.msra.mxu0 %v467
  %629 = vmatpush.bf16.msra.mxu0 %v466
  %630 = vmatpush.bf16.msra.mxu0 %v465
  %631 = vmatmul.bf16.gmra.mxu0 %v31
  %v632 = vpop.f32.mrf.mxu0
  %v633 = vadd.f32 %v620, %v632
  %v634 = vpop.f32.mrf.mxu0
  %635 = vdwg.mxu0
  %636 = vmatpush.bf16.msra.mxu0 %v480
  %637 = vmatpush.bf16.msra.mxu0 %v479
  %638 = vmatpush.bf16.msra.mxu0 %v478
  %639 = vmatpush.bf16.msra.mxu0 %v477
  %640 = vmatpush.bf16.msra.mxu0 %v476
  %641 = vmatpush.bf16.msra.mxu0 %v475
  %642 = vmatpush.bf16.msra.mxu0 %v474
  %643 = vmatpush.bf16.msra.mxu0 %v473
  %644 = vmatmul.bf16.gmra.mxu0 %v32
  %v645 = vpop.f32.mrf.mxu0
  %v646 = vadd.f32 %v633, %v645
  %v647 = vpop.f32.mrf.mxu0
  %648 = vdwg.mxu0
  %v649 = vadd.f32 %v24, %v646
  %650 = vst [vmem:[%s2] sm:$0xff] %v649
  // Predicated region
  $region14: #{tr_forward.2} parent=0 // pred_check
    _
  $region15: #{tr_forward.2} parent=0 // pred_check_branch
    %652 = sbr.rel (0) target = $region17
  $region16: #{tr_forward.2} parent=0 // pred_region
    _
  $region17: #{tr_forward.2} parent=0 // pred_fallthru
    _
  // Predicated region
  $region18: #{tr_forward.2} parent=0 // pred_check
    _
  $region19: #{tr_forward.2} parent=0 // pred_check_branch
    %654 = sbr.rel (0) target = $region21
  $region20: #{tr_forward.2} parent=0 // pred_region
    _
  $region21: #{tr_forward.2} parent=0 // pred_fallthru
    _

</llo_original>
